<compile_context>
chip_gen: v7x
topology: tpu7x:2x2x1
jax: 0.10.0
libtpu: 0.0.40
codegen_flags: <defaults>
</compile_context>

<pallas_src>
import jax
import jax.numpy as jnp
import numpy as np
from jax.experimental import pallas as pl
from jax.experimental.pallas import tpu as pltpu

# ----------------------------- configuration -------------------------------
N = 2            # batch
IN_CH = 8        # in_channels
MID_CH = 16      # mid_channels
OUT_CH = 8       # out_channels
RED_CH = 8       # reduction_channels
T = 16           # sequence length
K = 3            # kernel_size
DILATIONS = (1, 2, 3)
B = len(DILATIONS)
NT = N * T
MAXPAD = max(DILATIONS) * (K - 1) // 2      # SAME padding, stride 1
BN_EPS = 1e-5


def _tap_offsets(d):
    """Relative time offsets of the K taps of a SAME-padded dilated conv."""
    pad_left = d * (K - 1) // 2
    return [k * d - pad_left for k in range(K)]


# All unique tap offsets (including 0) over every dilation, e.g. -3..3 -> 7.
ALL_OFFS = tuple(sorted({o for d in DILATIONS for o in _tap_offsets(d)}))
NOFF = len(ALL_OFFS)

# ---------------- packed parameter layout (single f32 array) ----------------
PACK_COLS = max(IN_CH, MID_CH, RED_CH, B * OUT_CH, 4 * OUT_CH, NT)   # 32

# Per-channel vectors / biases (one row each).
R_SCALE1, R_SHIFT1, R_ALPHA1 = 0, 1, 2
R_SHIFT2, R_ALPHA2 = 3, 4
R_BL1, R_BL2 = 5, 6
VEC_ROWS = 8                                 # padded to a sublane multiple

# Weight matrices (every block start is a multiple of 8 -> aligned slices).
R_W1 = VEC_ROWS                              # (IN_CH, MID_CH)  bn2-scale folded
R_W2P = R_W1 + IN_CH                         # (NOFF*MID_CH, B*OUT_CH) block-packed
R_WL1 = R_W2P + NOFF * MID_CH                # (4*OUT_CH, RED_CH)
R_WL2P = R_WL1 + 4 * OUT_CH                  # (RED_CH, B*OUT_CH)
R_SALL = R_WL2P + RED_CH                     # (NOFF*NT, NT) block-diag shift mats
TOTAL_ROWS = R_SALL + NOFF * NT              # 392


# ------------------------------- kernel ------------------------------------
def dtdnnss_kernel(x_ref, p_ref, out_ref):
    # ---- unpack packed parameters (sublane-aligned static row slices) ------
    scale1 = p_ref[R_SCALE1:R_SCALE1 + 1, 0:IN_CH]
    shift1 = p_ref[R_SHIFT1:R_SHIFT1 + 1, 0:IN_CH]
    alpha1 = p_ref[R_ALPHA1:R_ALPHA1 + 1, 0:IN_CH]
    shift2 = p_ref[R_SHIFT2:R_SHIFT2 + 1, 0:MID_CH]
    alpha2 = p_ref[R_ALPHA2:R_ALPHA2 + 1, 0:MID_CH]
    bl1 = p_ref[R_BL1:R_BL1 + 1, 0:RED_CH]
    bl2 = p_ref[R_BL2:R_BL2 + 1, 0:B * OUT_CH]

    w1f = p_ref[R_W1:R_W1 + IN_CH, 0:MID_CH]                   # w1 * scale2
    w2p = p_ref[R_W2P:R_W2P + NOFF * MID_CH, 0:B * OUT_CH]
    wl1 = p_ref[R_WL1:R_WL1 + 4 * OUT_CH, 0:RED_CH]
    wl2p = p_ref[R_WL2P:R_WL2P + RED_CH, 0:B * OUT_CH]
    s_all = p_ref[R_SALL:R_SALL + NOFF * NT, 0:NT]

    # ---- bn1 (folded) + PReLU -> 1x1 conv (bn2 scale folded) + PReLU -------
    x = x_ref[...]                                             # (NT, IN_CH)
    h = x * scale1 + shift1
    h = jnp.where(h >= 0, h, alpha1 * h)
    h = jnp.dot(h, w1f, preferred_element_type=jnp.float32) + shift2
    h = jnp.where(h >= 0, h, alpha2 * h)                       # (NT, MID_CH)

    # ---- every time-shifted copy of h (all offsets x all batch elements)
    #      with ONE block-diagonal shift-matrix matmul -----------------------
    sh_all = jnp.dot(s_all, h, preferred_element_type=jnp.float32)  # (NOFF*NT, MID)
    taps = jnp.concatenate(
        [sh_all[i * NT:(i + 1) * NT, :] for i in range(NOFF)],
        axis=1)                                                # (NT, NOFF*MID)

    # ---- all dilated-conv branches fused into ONE matmul -------------------
    conv = jnp.dot(taps, w2p, preferred_element_type=jnp.float32)   # (NT, B*OUT)
    f_sum = conv[:, 0:OUT_CH]
    for b in range(1, B):
        f_sum = f_sum + conv[:, b * OUT_CH:(b + 1) * OUT_CH]        # (NT, OUT)

    # ---- StatsSelect: high-order stats pool over time (per batch element) --
    stats_rows = []
    for n in range(N):
        fs = f_sum[n * T:(n + 1) * T, :]                       # (T, OUT)
        mean = jnp.mean(fs, axis=0, keepdims=True)
        cen = fs - mean
        var = jnp.sum(cen * cen, axis=0, keepdims=True) * (1.0 / (T - 1))
        std = jnp.sqrt(var)
        inv_std = 1.0 / jnp.maximum(std, 1e-8)                 # computed once
        nrm = cen * inv_std
        nrm2 = nrm * nrm
        skew = jnp.mean(nrm2 * nrm, axis=0, keepdims=True)
        kurt = jnp.mean(nrm2 * nrm2, axis=0, keepdims=True)
        stats_rows.append(jnp.concatenate([mean, std, skew, kurt], axis=1))
    stats = jnp.concatenate(stats_rows, axis=0)                # (N, 4*OUT)

    # ---- branch-select MLP: batched over N and over branches ---------------
    z = jnp.dot(stats, wl1, preferred_element_type=jnp.float32) + bl1      # (N, RED)
    logits = jnp.dot(z, wl2p, preferred_element_type=jnp.float32) + bl2    # (N, B*OUT)

    lgs = [logits[:, b * OUT_CH:(b + 1) * OUT_CH] for b in range(B)]
    m = lgs[0]
    for lb in lgs[1:]:
        m = jnp.maximum(m, lb)
    ex = [jnp.exp(lb - m) for lb in lgs]
    den = ex[0]
    for e in ex[1:]:
        den = den + e
    inv_den = 1.0 / den                                        # computed once
    wts = [e * inv_den for e in ex]                            # each (N, OUT)

    # ---- weighted branch sum + input copy, one full-tile store -------------
    rows = []
    for n in range(N):
        o_n = conv[n * T:(n + 1) * T, 0:OUT_CH] * wts[0][n:n + 1, :]
        for b in range(1, B):
            o_n = o_n + (conv[n * T:(n + 1) * T, b * OUT_CH:(b + 1) * OUT_CH]
                         * wts[b][n:n + 1, :])
        rows.append(jnp.concatenate([x[n * T:(n + 1) * T, :], o_n], axis=1))
    out_ref[...] = jnp.concatenate(rows, axis=0)               # (NT, IN+OUT)


# --------------------------- parameter packing ------------------------------
def pack_params(p):
    """Pack all parameters into ONE (TOTAL_ROWS, PACK_COLS) f32 array.

    Done once at init time (hoisted out of the per-call jit)."""
    buf = np.zeros((TOTAL_ROWS, PACK_COLS), np.float32)

    def put_row(r, v):
        v = np.asarray(v, np.float32).reshape(-1)
        buf[r, :v.shape[0]] = v

    def put_mat(r0, m):
        m = np.asarray(m, np.float32)
        buf[r0:r0 + m.shape[0], :m.shape[1]] = m

    put_row(R_SCALE1, p['scale1'])
    put_row(R_SHIFT1, p['shift1'])
    put_row(R_ALPHA1, p['alpha1'])
    put_row(R_SHIFT2, p['shift2'])
    put_row(R_ALPHA2, p['alpha2'])
    put_row(R_BL1, p['bl1'])
    put_row(R_BL2, np.asarray(p['bl2'], np.float32).reshape(-1))  # branch-major

    # bn2 scale folded into the 1x1 conv weight (column scaling commutes).
    put_mat(R_W1, np.asarray(p['w1'], np.float32)
            * np.asarray(p['scale2'], np.float32).reshape(1, -1))

    # Block-packed dilated-conv weight over the unique tap offsets: zero rows
    # for taps a branch does not use -> one fused (NT, NOFF*MID)@(NOFF*MID, B*OUT).
    w2 = np.asarray(p['w2'], np.float32)                 # (B, K, MID, OUT)
    w2p = np.zeros((NOFF * MID_CH, B * OUT_CH), np.float32)
    for b, d in enumerate(DILATIONS):
        for k, o in enumerate(_tap_offsets(d)):
            i = ALL_OFFS.index(o)
            w2p[i * MID_CH:(i + 1) * MID_CH, b * OUT_CH:(b + 1) * OUT_CH] += w2[b, k]
    put_mat(R_W2P, w2p)

    put_mat(R_WL1, p['wl1'])
    wl2p = np.concatenate([np.asarray(p['wl2'][b], np.float32) for b in range(B)],
                          axis=1)                        # (RED, B*OUT)
    put_mat(R_WL2P, wl2p)

    # Block-diagonal (over batch) shift matrices, stacked over all offsets.
    s = np.zeros((NOFF * NT, NT), np.float32)
    for i, o in enumerate(ALL_OFFS):
        for n in range(N):
            for t in range(T):
                j = t + o
                if 0 <= j < T:
                    s[i * NT + n * T + t, n * T + j] = 1.0
    put_mat(R_SALL, s)

    return jnp.asarray(buf)


# ------------------------------- wrapper ------------------------------------
@jax.jit
def dtdnnss_forward(x_nct, packed):
    """x_nct: (N, IN_CH, T) float32; packed: pre-packed params.
    Returns (N, IN_CH + OUT_CH, T)."""
    x2d = jnp.reshape(jnp.transpose(x_nct, (0, 2, 1)), (NT, IN_CH))

    out2d = pl.pallas_call(
        dtdnnss_kernel,
        out_shape=jax.ShapeDtypeStruct((NT, IN_CH + OUT_CH), jnp.float32),
        in_specs=[pl.BlockSpec(memory_space=pltpu.MemorySpace.VMEM),
                  pl.BlockSpec(memory_space=pltpu.MemorySpace.VMEM)],
        out_specs=pl.BlockSpec(memory_space=pltpu.MemorySpace.VMEM),
    )(x2d, packed)

    # Kernel already emits [inputs | result] along channels.
    out_ntc = jnp.reshape(out2d, (N, T, IN_CH + OUT_CH))
    return jnp.transpose(out_ntc, (0, 2, 1))                  # (N, IN+OUT, T)


# --------------------------- parameter creation ------------------------------
def make_params(key):
    ks = jax.random.split(key, 16)

    def bn_fold(kg, kb, km, kv, c):
        gamma = 1.0 + 0.1 * jax.random.normal(kg, (c,), jnp.float32)
        beta = 0.1 * jax.random.normal(kb, (c,), jnp.float32)
        rmean = 0.1 * jax.random.normal(km, (c,), jnp.float32)
        rvar = jax.random.uniform(kv, (c,), jnp.float32, 0.5, 1.5)
        scale = gamma / jnp.sqrt(rvar + BN_EPS)
        shift = beta - rmean * scale
        return scale.reshape(1, c), shift.reshape(1, c)

    scale1, shift1 = bn_fold(ks[0], ks[1], ks[2], ks[3], IN_CH)
    scale2, shift2 = bn_fold(ks[4], ks[5], ks[6], ks[7], MID_CH)

    alpha1 = jnp.full((1, IN_CH), 0.25, jnp.float32)     # PReLU default init
    alpha2 = jnp.full((1, MID_CH), 0.25, jnp.float32)

    w1 = 0.2 * jax.random.normal(ks[8], (IN_CH, MID_CH), jnp.float32)
    w2 = 0.2 * jax.random.normal(ks[9], (B, K, MID_CH, OUT_CH), jnp.float32)

    wl1 = 0.2 * jax.random.normal(ks[10], (4 * OUT_CH, RED_CH), jnp.float32)
    bl1 = 0.1 * jax.random.normal(ks[11], (1, RED_CH), jnp.float32)
    wl2 = 0.2 * jax.random.normal(ks[12], (B, RED_CH, OUT_CH), jnp.float32)
    bl2 = 0.1 * jax.random.normal(ks[13], (B, OUT_CH), jnp.float32)

    return dict(scale1=scale1, shift1=shift1, alpha1=alpha1, w1=w1,
                scale2=scale2, shift2=shift2, alpha2=alpha2, w2=w2,
                wl1=wl1, bl1=bl1, wl2=wl2, bl2=bl2)


# ----------------------------- pure-JAX reference ---------------------------
def reference_forward(x_nct, p):
    x = jnp.transpose(x_nct, (0, 2, 1))                  # (N, T, IN_CH)
    h = x * p['scale1'] + p['shift1']
    h = jnp.where(h >= 0, h, p['alpha1'] * h)
    h = jnp.einsum('ntc,cd->ntd', h, p['w1'])
    h = h * p['scale2'] + p['shift2']
    h = jnp.where(h >= 0, h, p['alpha2'] * h)
    hp = jnp.pad(h, ((0, 0), (MAXPAD, MAXPAD), (0, 0)))
    branches = []
    for b, d in enumerate(DILATIONS):
        pad_left = d * (K - 1) // 2
        acc = jnp.zeros((N, T, OUT_CH), jnp.float32)
        for k in range(K):
            s = MAXPAD - pad_left + k * d
            acc = acc + jnp.einsum('ntc,cd->ntd', hp[:, s:s + T, :], p['w2'][b, k])
        branches.append(acc)
    f = jnp.stack(branches, axis=1)                      # (N, B, T, OUT_CH)
    fsum = jnp.sum(f, axis=1)
    mean = jnp.mean(fsum, axis=1, keepdims=True)
    cen = fsum - mean
    var = jnp.sum(cen * cen, axis=1, keepdims=True) / (T - 1)
    std = jnp.sqrt(var)
    nrm = cen / jnp.maximum(std, 1e-8)
    skew = jnp.mean(nrm ** 3, axis=1, keepdims=True)
    kurt = jnp.mean(nrm ** 4, axis=1, keepdims=True)
    stats = jnp.concatenate([mean, std, skew, kurt], axis=-1)[:, 0, :]
    z = stats @ p['wl1'] + p['bl1'][0]
    logits = jnp.stack([z @ p['wl2'][b] + p['bl2'][b] for b in range(B)], axis=1)
    w = jax.nn.softmax(logits, axis=1)[:, :, None, :]    # (N, B, 1, OUT_CH)
    out = jnp.sum(f * w, axis=1)                         # (N, T, OUT_CH)
    out_nct = jnp.transpose(out, (0, 2, 1))
    return jnp.concatenate([x_nct, out_nct], axis=1)


# ---------------------------------- main -------------------------------------
if __name__ == "__main__":
    key = jax.random.PRNGKey(0)
    kx, kp = jax.random.split(key)
    x = jax.random.normal(kx, (N, IN_CH, T), jnp.float32)   # PyTorch NCT layout
    params = make_params(kp)
    packed = pack_params(params)                            # once, off hot path

    y = dtdnnss_forward(x, packed)
    y = jax.block_until_ready(y)

    y_ref = reference_forward(x, params)
    np.testing.assert_allclose(np.asarray(y), np.asarray(y_ref),
                               rtol=1e-4, atol=1e-4)
    assert y.shape == (N, IN_CH + OUT_CH, T)
    print("KERNEL_OK")
</pallas_src>

<mosaic_0001>
module attributes {stable_mosaic.version = 11 : i64} {
  func.func @dtdnnss_kernel(%arg0: memref<32x8xf32, #tpu.memory_space<vmem>>, %arg1: memref<392x32xf32, #tpu.memory_space<vmem>>, %arg2: memref<32x16xf32, #tpu.memory_space<vmem>>) attributes {dimension_semantics = [], scalar_prefetch = 0 : i64, scratch_operands = 0 : i64, tpu.core_type = #tpu.core_type<tc>} {
    %c0 = arith.constant 0 : index
    %c0_0 = arith.constant 0 : index
    %0 = vector.load %arg1[%c0, %c0_0] : memref<392x32xf32, #tpu.memory_space<vmem>>, vector<1x8xf32>
    %c1 = arith.constant 1 : index
    %c0_1 = arith.constant 0 : index
    %1 = vector.load %arg1[%c1, %c0_1] : memref<392x32xf32, #tpu.memory_space<vmem>>, vector<1x8xf32>
    %c2 = arith.constant 2 : index
    %c0_2 = arith.constant 0 : index
    %2 = vector.load %arg1[%c2, %c0_2] : memref<392x32xf32, #tpu.memory_space<vmem>>, vector<1x8xf32>
    %c3 = arith.constant 3 : index
    %c0_3 = arith.constant 0 : index
    %3 = vector.load %arg1[%c3, %c0_3] : memref<392x32xf32, #tpu.memory_space<vmem>>, vector<1x16xf32>
    %c4 = arith.constant 4 : index
    %c0_4 = arith.constant 0 : index
    %4 = vector.load %arg1[%c4, %c0_4] : memref<392x32xf32, #tpu.memory_space<vmem>>, vector<1x16xf32>
    %c5 = arith.constant 5 : index
    %c0_5 = arith.constant 0 : index
    %5 = vector.load %arg1[%c5, %c0_5] : memref<392x32xf32, #tpu.memory_space<vmem>>, vector<1x8xf32>
    %c6 = arith.constant 6 : index
    %c0_6 = arith.constant 0 : index
    %6 = vector.load %arg1[%c6, %c0_6] : memref<392x32xf32, #tpu.memory_space<vmem>>, vector<1x24xf32>
    %c8 = arith.constant 8 : index
    %c0_7 = arith.constant 0 : index
    %7 = vector.load %arg1[%c8, %c0_7] : memref<392x32xf32, #tpu.memory_space<vmem>>, vector<8x16xf32>
    %c16 = arith.constant 16 : index
    %c0_8 = arith.constant 0 : index
    %8 = vector.load %arg1[%c16, %c0_8] : memref<392x32xf32, #tpu.memory_space<vmem>>, vector<112x24xf32>
    %c128 = arith.constant 128 : index
    %c0_9 = arith.constant 0 : index
    %9 = vector.load %arg1[%c128, %c0_9] : memref<392x32xf32, #tpu.memory_space<vmem>>, vector<32x8xf32>
    %c160 = arith.constant 160 : index
    %c0_10 = arith.constant 0 : index
    %10 = vector.load %arg1[%c160, %c0_10] : memref<392x32xf32, #tpu.memory_space<vmem>>, vector<8x24xf32>
    %c168 = arith.constant 168 : index
    %c0_11 = arith.constant 0 : index
    %11 = vector.load %arg1[%c168, %c0_11] : memref<392x32xf32, #tpu.memory_space<vmem>>, vector<224x32xf32>
    %c0_12 = arith.constant 0 : index
    %c0_13 = arith.constant 0 : index
    %12 = vector.load %arg0[%c0_12, %c0_13] : memref<32x8xf32, #tpu.memory_space<vmem>>, vector<32x8xf32>
    %13 = vector.broadcast %0 : vector<1x8xf32> to vector<32x8xf32>
    %14 = arith.mulf %12, %13 : vector<32x8xf32>
    %15 = vector.broadcast %1 : vector<1x8xf32> to vector<32x8xf32>
    %16 = arith.addf %14, %15 : vector<32x8xf32>
    %cst = arith.constant 0.000000e+00 : f32
    %17 = vector.broadcast %cst : f32 to vector<32x8xf32>
    %18 = arith.cmpf oge, %16, %17 : vector<32x8xf32>
    %19 = vector.broadcast %2 : vector<1x8xf32> to vector<32x8xf32>
    %20 = arith.mulf %19, %16 : vector<32x8xf32>
    %21 = arith.select %18, %16, %20 : vector<32x8xi1>, vector<32x8xf32>
    %cst_14 = arith.constant dense<0.000000e+00> : vector<32x16xf32>
    %22 = tpu.matmul %21, %7, %cst_14 {dimension_numbers = #tpu.dot_dimension_numbers<[1], [0], [0], [1], [0, 0, 1, 1], [], []>} : vector<32x8xf32>, vector<8x16xf32>, vector<32x16xf32> -> vector<32x16xf32>
    %23 = vector.broadcast %3 : vector<1x16xf32> to vector<32x16xf32>
    %24 = arith.addf %22, %23 : vector<32x16xf32>
    %cst_15 = arith.constant 0.000000e+00 : f32
    %25 = vector.broadcast %cst_15 : f32 to vector<32x16xf32>
    %26 = arith.cmpf oge, %24, %25 : vector<32x16xf32>
    %27 = vector.broadcast %4 : vector<1x16xf32> to vector<32x16xf32>
    %28 = arith.mulf %27, %24 : vector<32x16xf32>
    %29 = arith.select %26, %24, %28 : vector<32x16xi1>, vector<32x16xf32>
    %cst_16 = arith.constant dense<0.000000e+00> : vector<224x16xf32>
    %30 = tpu.matmul %11, %29, %cst_16 {dimension_numbers = #tpu.dot_dimension_numbers<[1], [0], [0], [1], [0, 0, 1, 1], [], []>} : vector<224x32xf32>, vector<32x16xf32>, vector<224x16xf32> -> vector<224x16xf32>
    %31 = vector.extract_strided_slice %30 {offsets = [0, 0], sizes = [32, 16], strides = [1, 1]} : vector<224x16xf32> to vector<32x16xf32>
    %32 = vector.extract_strided_slice %30 {offsets = [32, 0], sizes = [32, 16], strides = [1, 1]} : vector<224x16xf32> to vector<32x16xf32>
    %33 = vector.extract_strided_slice %30 {offsets = [64, 0], sizes = [32, 16], strides = [1, 1]} : vector<224x16xf32> to vector<32x16xf32>
    %34 = vector.extract_strided_slice %30 {offsets = [96, 0], sizes = [32, 16], strides = [1, 1]} : vector<224x16xf32> to vector<32x16xf32>
    %35 = vector.extract_strided_slice %30 {offsets = [128, 0], sizes = [32, 16], strides = [1, 1]} : vector<224x16xf32> to vector<32x16xf32>
    %36 = vector.extract_strided_slice %30 {offsets = [160, 0], sizes = [32, 16], strides = [1, 1]} : vector<224x16xf32> to vector<32x16xf32>
    %37 = vector.extract_strided_slice %30 {offsets = [192, 0], sizes = [32, 16], strides = [1, 1]} : vector<224x16xf32> to vector<32x16xf32>
    %38 = tpu.concatenate %31, %32, %33, %34, %35, %36, %37 in 1 : vector<32x16xf32>, vector<32x16xf32>, vector<32x16xf32>, vector<32x16xf32>, vector<32x16xf32>, vector<32x16xf32>, vector<32x16xf32> -> vector<32x112xf32>
    %cst_17 = arith.constant dense<0.000000e+00> : vector<32x24xf32>
    %39 = tpu.matmul %38, %8, %cst_17 {dimension_numbers = #tpu.dot_dimension_numbers<[1], [0], [0], [1], [0, 0, 1, 1], [], []>} : vector<32x112xf32>, vector<112x24xf32>, vector<32x24xf32> -> vector<32x24xf32>
    %40 = vector.extract_strided_slice %39 {offsets = [0, 0], sizes = [32, 8], strides = [1, 1]} : vector<32x24xf32> to vector<32x8xf32>
    %41 = vector.extract_strided_slice %39 {offsets = [0, 8], sizes = [32, 8], strides = [1, 1]} : vector<32x24xf32> to vector<32x8xf32>
    %42 = arith.addf %40, %41 : vector<32x8xf32>
    %43 = vector.extract_strided_slice %39 {offsets = [0, 16], sizes = [32, 8], strides = [1, 1]} : vector<32x24xf32> to vector<32x8xf32>
    %44 = arith.addf %42, %43 : vector<32x8xf32>
    %45 = vector.extract_strided_slice %44 {offsets = [0, 0], sizes = [16, 8], strides = [1, 1]} : vector<32x8xf32> to vector<16x8xf32>
    %cst_18 = arith.constant dense<0.000000e+00> : vector<8xf32>
    %46 = vector.multi_reduction <add>, %45, %cst_18 [0] : vector<16x8xf32> to vector<8xf32>
    %47 = vector.shape_cast %46 : vector<8xf32> to vector<1x8xf32>
    %cst_19 = arith.constant 1.600000e+01 : f32
    %48 = vector.broadcast %cst_19 : f32 to vector<1x8xf32>
    %49 = arith.divf %47, %48 : vector<1x8xf32>
    %50 = vector.broadcast %49 : vector<1x8xf32> to vector<16x8xf32>
    %51 = arith.subf %45, %50 : vector<16x8xf32>
    %52 = arith.mulf %51, %51 : vector<16x8xf32>
    %cst_20 = arith.constant dense<0.000000e+00> : vector<8xf32>
    %53 = vector.multi_reduction <add>, %52, %cst_20 [0] : vector<16x8xf32> to vector<8xf32>
    %54 = vector.shape_cast %53 : vector<8xf32> to vector<1x8xf32>
    %cst_21 = arith.constant 0.0666666701 : f32
    %55 = vector.broadcast %cst_21 : f32 to vector<1x8xf32>
    %56 = arith.mulf %54, %55 : vector<1x8xf32>
    %57 = math.sqrt %56 : vector<1x8xf32>
    %cst_22 = arith.constant 9.99999993E-9 : f32
    %58 = vector.broadcast %cst_22 : f32 to vector<1x8xf32>
    %59 = arith.maximumf %57, %58 : vector<1x8xf32>
    %cst_23 = arith.constant 1.000000e+00 : f32
    %60 = vector.broadcast %cst_23 : f32 to vector<1x8xf32>
    %61 = arith.divf %60, %59 : vector<1x8xf32>
    %62 = vector.broadcast %61 : vector<1x8xf32> to vector<16x8xf32>
    %63 = arith.mulf %51, %62 : vector<16x8xf32>
    %64 = arith.mulf %63, %63 : vector<16x8xf32>
    %65 = arith.mulf %64, %63 : vector<16x8xf32>
    %cst_24 = arith.constant dense<0.000000e+00> : vector<8xf32>
    %66 = vector.multi_reduction <add>, %65, %cst_24 [0] : vector<16x8xf32> to vector<8xf32>
    %67 = vector.shape_cast %66 : vector<8xf32> to vector<1x8xf32>
    %cst_25 = arith.constant 1.600000e+01 : f32
    %68 = vector.broadcast %cst_25 : f32 to vector<1x8xf32>
    %69 = arith.divf %67, %68 : vector<1x8xf32>
    %70 = arith.mulf %64, %64 : vector<16x8xf32>
    %cst_26 = arith.constant dense<0.000000e+00> : vector<8xf32>
    %71 = vector.multi_reduction <add>, %70, %cst_26 [0] : vector<16x8xf32> to vector<8xf32>
    %72 = vector.shape_cast %71 : vector<8xf32> to vector<1x8xf32>
    %cst_27 = arith.constant 1.600000e+01 : f32
    %73 = vector.broadcast %cst_27 : f32 to vector<1x8xf32>
    %74 = arith.divf %72, %73 : vector<1x8xf32>
    %75 = tpu.concatenate %49, %57, %69, %74 in 1 : vector<1x8xf32>, vector<1x8xf32>, vector<1x8xf32>, vector<1x8xf32> -> vector<1x32xf32>
    %76 = vector.extract_strided_slice %44 {offsets = [16, 0], sizes = [16, 8], strides = [1, 1]} : vector<32x8xf32> to vector<16x8xf32>
    %cst_28 = arith.constant dense<0.000000e+00> : vector<8xf32>
    %77 = vector.multi_reduction <add>, %76, %cst_28 [0] : vector<16x8xf32> to vector<8xf32>
    %78 = vector.shape_cast %77 : vector<8xf32> to vector<1x8xf32>
    %cst_29 = arith.constant 1.600000e+01 : f32
    %79 = vector.broadcast %cst_29 : f32 to vector<1x8xf32>
    %80 = arith.divf %78, %79 : vector<1x8xf32>
    %81 = vector.broadcast %80 : vector<1x8xf32> to vector<16x8xf32>
    %82 = arith.subf %76, %81 : vector<16x8xf32>
    %83 = arith.mulf %82, %82 : vector<16x8xf32>
    %cst_30 = arith.constant dense<0.000000e+00> : vector<8xf32>
    %84 = vector.multi_reduction <add>, %83, %cst_30 [0] : vector<16x8xf32> to vector<8xf32>
    %85 = vector.shape_cast %84 : vector<8xf32> to vector<1x8xf32>
    %cst_31 = arith.constant 0.0666666701 : f32
    %86 = vector.broadcast %cst_31 : f32 to vector<1x8xf32>
    %87 = arith.mulf %85, %86 : vector<1x8xf32>
    %88 = math.sqrt %87 : vector<1x8xf32>
    %cst_32 = arith.constant 9.99999993E-9 : f32
    %89 = vector.broadcast %cst_32 : f32 to vector<1x8xf32>
    %90 = arith.maximumf %88, %89 : vector<1x8xf32>
    %cst_33 = arith.constant 1.000000e+00 : f32
    %91 = vector.broadcast %cst_33 : f32 to vector<1x8xf32>
    %92 = arith.divf %91, %90 : vector<1x8xf32>
    %93 = vector.broadcast %92 : vector<1x8xf32> to vector<16x8xf32>
    %94 = arith.mulf %82, %93 : vector<16x8xf32>
    %95 = arith.mulf %94, %94 : vector<16x8xf32>
    %96 = arith.mulf %95, %94 : vector<16x8xf32>
    %cst_34 = arith.constant dense<0.000000e+00> : vector<8xf32>
    %97 = vector.multi_reduction <add>, %96, %cst_34 [0] : vector<16x8xf32> to vector<8xf32>
    %98 = vector.shape_cast %97 : vector<8xf32> to vector<1x8xf32>
    %cst_35 = arith.constant 1.600000e+01 : f32
    %99 = vector.broadcast %cst_35 : f32 to vector<1x8xf32>
    %100 = arith.divf %98, %99 : vector<1x8xf32>
    %101 = arith.mulf %95, %95 : vector<16x8xf32>
    %cst_36 = arith.constant dense<0.000000e+00> : vector<8xf32>
    %102 = vector.multi_reduction <add>, %101, %cst_36 [0] : vector<16x8xf32> to vector<8xf32>
    %103 = vector.shape_cast %102 : vector<8xf32> to vector<1x8xf32>
    %cst_37 = arith.constant 1.600000e+01 : f32
    %104 = vector.broadcast %cst_37 : f32 to vector<1x8xf32>
    %105 = arith.divf %103, %104 : vector<1x8xf32>
    %106 = tpu.concatenate %80, %88, %100, %105 in 1 : vector<1x8xf32>, vector<1x8xf32>, vector<1x8xf32>, vector<1x8xf32> -> vector<1x32xf32>
    %107 = tpu.concatenate %75, %106 in 0 : vector<1x32xf32>, vector<1x32xf32> -> vector<2x32xf32>
    %cst_38 = arith.constant dense<0.000000e+00> : vector<2x8xf32>
    %108 = tpu.matmul %107, %9, %cst_38 {dimension_numbers = #tpu.dot_dimension_numbers<[1], [0], [0], [1], [0, 0, 1, 1], [], []>} : vector<2x32xf32>, vector<32x8xf32>, vector<2x8xf32> -> vector<2x8xf32>
    %109 = vector.broadcast %5 : vector<1x8xf32> to vector<2x8xf32>
    %110 = arith.addf %108, %109 : vector<2x8xf32>
    %cst_39 = arith.constant dense<0.000000e+00> : vector<2x24xf32>
    %111 = tpu.matmul %110, %10, %cst_39 {dimension_numbers = #tpu.dot_dimension_numbers<[1], [0], [0], [1], [0, 0, 1, 1], [], []>} : vector<2x8xf32>, vector<8x24xf32>, vector<2x24xf32> -> vector<2x24xf32>
    %112 = vector.broadcast %6 : vector<1x24xf32> to vector<2x24xf32>
    %113 = arith.addf %111, %112 : vector<2x24xf32>
    %114 = vector.extract_strided_slice %113 {offsets = [0, 0], sizes = [2, 8], strides = [1, 1]} : vector<2x24xf32> to vector<2x8xf32>
    %115 = vector.extract_strided_slice %113 {offsets = [0, 8], sizes = [2, 8], strides = [1, 1]} : vector<2x24xf32> to vector<2x8xf32>
    %116 = vector.extract_strided_slice %113 {offsets = [0, 16], sizes = [2, 8], strides = [1, 1]} : vector<2x24xf32> to vector<2x8xf32>
    %117 = arith.maximumf %114, %115 : vector<2x8xf32>
    %118 = arith.maximumf %117, %116 : vector<2x8xf32>
    %119 = arith.subf %114, %118 : vector<2x8xf32>
    %120 = math.exp %119 : vector<2x8xf32>
    %121 = arith.subf %115, %118 : vector<2x8xf32>
    %122 = math.exp %121 : vector<2x8xf32>
    %123 = arith.subf %116, %118 : vector<2x8xf32>
    %124 = math.exp %123 : vector<2x8xf32>
    %125 = arith.addf %120, %122 : vector<2x8xf32>
    %126 = arith.addf %125, %124 : vector<2x8xf32>
    %cst_40 = arith.constant 1.000000e+00 : f32
    %127 = vector.broadcast %cst_40 : f32 to vector<2x8xf32>
    %128 = arith.divf %127, %126 : vector<2x8xf32>
    %129 = arith.mulf %120, %128 : vector<2x8xf32>
    %130 = arith.mulf %122, %128 : vector<2x8xf32>
    %131 = arith.mulf %124, %128 : vector<2x8xf32>
    %132 = vector.extract_strided_slice %39 {offsets = [0, 0], sizes = [16, 8], strides = [1, 1]} : vector<32x24xf32> to vector<16x8xf32>
    %133 = vector.extract_strided_slice %129 {offsets = [0, 0], sizes = [1, 8], strides = [1, 1]} : vector<2x8xf32> to vector<1x8xf32>
    %134 = vector.broadcast %133 : vector<1x8xf32> to vector<16x8xf32>
    %135 = arith.mulf %132, %134 : vector<16x8xf32>
    %136 = vector.extract_strided_slice %39 {offsets = [0, 8], sizes = [16, 8], strides = [1, 1]} : vector<32x24xf32> to vector<16x8xf32>
    %137 = vector.extract_strided_slice %130 {offsets = [0, 0], sizes = [1, 8], strides = [1, 1]} : vector<2x8xf32> to vector<1x8xf32>
    %138 = vector.broadcast %137 : vector<1x8xf32> to vector<16x8xf32>
    %139 = arith.mulf %136, %138 : vector<16x8xf32>
    %140 = arith.addf %135, %139 : vector<16x8xf32>
    %141 = vector.extract_strided_slice %39 {offsets = [0, 16], sizes = [16, 8], strides = [1, 1]} : vector<32x24xf32> to vector<16x8xf32>
    %142 = vector.extract_strided_slice %131 {offsets = [0, 0], sizes = [1, 8], strides = [1, 1]} : vector<2x8xf32> to vector<1x8xf32>
    %143 = vector.broadcast %142 : vector<1x8xf32> to vector<16x8xf32>
    %144 = arith.mulf %141, %143 : vector<16x8xf32>
    %145 = arith.addf %140, %144 : vector<16x8xf32>
    %146 = vector.extract_strided_slice %12 {offsets = [0, 0], sizes = [16, 8], strides = [1, 1]} : vector<32x8xf32> to vector<16x8xf32>
    %147 = tpu.concatenate %146, %145 in 1 : vector<16x8xf32>, vector<16x8xf32> -> vector<16x16xf32>
    %148 = vector.extract_strided_slice %39 {offsets = [16, 0], sizes = [16, 8], strides = [1, 1]} : vector<32x24xf32> to vector<16x8xf32>
    %149 = vector.extract_strided_slice %129 {offsets = [1, 0], sizes = [1, 8], strides = [1, 1]} : vector<2x8xf32> to vector<1x8xf32>
    %150 = vector.broadcast %149 : vector<1x8xf32> to vector<16x8xf32>
    %151 = arith.mulf %148, %150 : vector<16x8xf32>
    %152 = vector.extract_strided_slice %39 {offsets = [16, 8], sizes = [16, 8], strides = [1, 1]} : vector<32x24xf32> to vector<16x8xf32>
    %153 = vector.extract_strided_slice %130 {offsets = [1, 0], sizes = [1, 8], strides = [1, 1]} : vector<2x8xf32> to vector<1x8xf32>
    %154 = vector.broadcast %153 : vector<1x8xf32> to vector<16x8xf32>
    %155 = arith.mulf %152, %154 : vector<16x8xf32>
    %156 = arith.addf %151, %155 : vector<16x8xf32>
    %157 = vector.extract_strided_slice %39 {offsets = [16, 16], sizes = [16, 8], strides = [1, 1]} : vector<32x24xf32> to vector<16x8xf32>
    %158 = vector.extract_strided_slice %131 {offsets = [1, 0], sizes = [1, 8], strides = [1, 1]} : vector<2x8xf32> to vector<1x8xf32>
    %159 = vector.broadcast %158 : vector<1x8xf32> to vector<16x8xf32>
    %160 = arith.mulf %157, %159 : vector<16x8xf32>
    %161 = arith.addf %156, %160 : vector<16x8xf32>
    %162 = vector.extract_strided_slice %12 {offsets = [16, 0], sizes = [16, 8], strides = [1, 1]} : vector<32x8xf32> to vector<16x8xf32>
    %163 = tpu.concatenate %162, %161 in 1 : vector<16x8xf32>, vector<16x8xf32> -> vector<16x16xf32>
    %164 = tpu.concatenate %147, %163 in 0 : vector<16x16xf32>, vector<16x16xf32> -> vector<32x16xf32>
    %c0_41 = arith.constant 0 : index
    %c0_42 = arith.constant 0 : index
    %165 = vector.load %arg2[%c0_41, %c0_42] : memref<32x16xf32, #tpu.memory_space<vmem>>, vector<32x16xf32>
    tpu.vector_store %arg2[%c0_41, %c0_42], %164 {strides = array<i32>} : memref<32x16xf32, #tpu.memory_space<vmem>>, vector<32x16xf32>,
    return
  }
}

</mosaic_0001>

<llo_original>
// kernel: dtdnnss_forward.1
$region0: #{dtdnnss_forward.1}
  #allocation0 [shape = 'u32[]', space=smem, size = 0x4, offset = 0x4, fixed_abs, tag = 'smem constant byte address 0x4 - core index']
  #allocation1 [shape = 'u32[144,128]{1,0:T(1,128)}', space=vmem, size = 0x12000, scoped, tag = 'internal scratch']
  %s0 = inlined_call_operand.vmem [shape: f32[32,8], index: 0, kind: input, shape index: {}]
  %s1 = inlined_call_operand.vmem [shape: f32[392,32], index: 1, kind: input, shape index: {}]
  %s2 = inlined_call_operand.vmem [shape: f32[32,16], index: 2, kind: output, shape index: {}]
  %s3 = sld [smem:[#allocation0]]
  $region18: #{dtdnnss_forward.1} parent=0
    _
  %s5 = ssub.s32 1, %s3
  %s6 = scalar_select 0, %s5, %s3
  // Predicated region
  $region2: #{dtdnnss_forward.1} parent=0 // pred_check
    _
  $region3: #{dtdnnss_forward.1} parent=0 // pred_check_branch
    %8 = sbr.rel (0) target = $region5
  $region4: #{dtdnnss_forward.1} parent=0 // pred_region
    _
  $region5: #{dtdnnss_forward.1} parent=0 // pred_fallthru
    _
  // Predicated region
  $region6: #{dtdnnss_forward.1} parent=0 // pred_check
    _
  $region7: #{dtdnnss_forward.1} parent=0 // pred_check_branch
    %10 = sbr.rel (0) target = $region9
  $region8: #{dtdnnss_forward.1} parent=0 // pred_region
    _
  $region9: #{dtdnnss_forward.1} parent=0 // pred_fallthru
    _
  %v11 = vld [vmem:[%s1] sm:$0x1]
  %v12 = vld [vmem:[%s1 + $0x1] sm:$0x1]
  %v13 = vld [vmem:[%s1 + $0x2] sm:$0x1]
  %v14 = vld [vmem:[%s1 + $0x3] sm:$0x1]
  %v15 = vld [vmem:[%s1 + $0x4] sm:$0x1]
  %v16 = vld [vmem:[%s1 + $0x5] sm:$0x1]
  %v17 = vld [vmem:[%s1 + $0x6] sm:$0x1]
  %v18 = vld [vmem:[%s1 + $0x8] sm:$0xff]
  %v19 = vld [vmem:[%s1 + $0x10] sm:$0xff]
  %v20 = vld [vmem:[%s1 + $0x18] sm:$0xff]
  %v21 = vld [vmem:[%s1 + $0x20] sm:$0xff]
  %v22 = vld [vmem:[%s1 + $0x28] sm:$0xff]
  %v23 = vld [vmem:[%s1 + $0x30] sm:$0xff]
  %v24 = vld [vmem:[%s1 + $0x38] sm:$0xff]
  %v25 = vld [vmem:[%s1 + $0x40] sm:$0xff]
  %v26 = vld [vmem:[%s1 + $0x48] sm:$0xff]
  %v27 = vld [vmem:[%s1 + $0x50] sm:$0xff]
  %v28 = vld [vmem:[%s1 + $0x58] sm:$0xff]
  %v29 = vld [vmem:[%s1 + $0x60] sm:$0xff]
  %v30 = vld [vmem:[%s1 + $0x68] sm:$0xff]
  %v31 = vld [vmem:[%s1 + $0x70] sm:$0xff]
  %v32 = vld [vmem:[%s1 + $0x78] sm:$0xff]
  %v33 = vld [vmem:[%s1 + $0x80] sm:$0xff]
  %v34 = vld [vmem:[%s1 + $0x88] sm:$0xff]
  %v35 = vld [vmem:[%s1 + $0x90] sm:$0xff]
  %v36 = vld [vmem:[%s1 + $0x98] sm:$0xff]
  %v37 = vld [vmem:[%s1 + $0xa0] sm:$0xff]
  %v38 = vld [vmem:[%s1 + $0xa8] sm:$0xff]
  %v39 = vld [vmem:[%s1 + $0xb0] sm:$0xff]
  %v40 = vld [vmem:[%s1 + $0xb8] sm:$0xff]
  %v41 = vld [vmem:[%s1 + $0xc0] sm:$0xff]
  %v42 = vld [vmem:[%s1 + $0xc8] sm:$0xff]
  %v43 = vld [vmem:[%s1 + $0xd0] sm:$0xff]
  %v44 = vld [vmem:[%s1 + $0xd8] sm:$0xff]
  %v45 = vld [vmem:[%s1 + $0xe0] sm:$0xff]
  %v46 = vld [vmem:[%s1 + $0xe8] sm:$0xff]
  %v47 = vld [vmem:[%s1 + $0xf0] sm:$0xff]
  %v48 = vld [vmem:[%s1 + $0xf8] sm:$0xff]
  %v49 = vld [vmem:[%s1 + $0x100] sm:$0xff]
  %v50 = vld [vmem:[%s1 + $0x108] sm:$0xff]
  %v51 = vld [vmem:[%s1 + $0x110] sm:$0xff]
  %v52 = vld [vmem:[%s1 + $0x118] sm:$0xff]
  %v53 = vld [vmem:[%s1 + $0x120] sm:$0xff]
  %v54 = vld [vmem:[%s1 + $0x128] sm:$0xff]
  %v55 = vld [vmem:[%s1 + $0x130] sm:$0xff]
  %v56 = vld [vmem:[%s1 + $0x138] sm:$0xff]
  %v57 = vld [vmem:[%s1 + $0x140] sm:$0xff]
  %v58 = vld [vmem:[%s1 + $0x148] sm:$0xff]
  %v59 = vld [vmem:[%s1 + $0x150] sm:$0xff]
  %v60 = vld [vmem:[%s1 + $0x158] sm:$0xff]
  %v61 = vld [vmem:[%s1 + $0x160] sm:$0xff]
  %v62 = vld [vmem:[%s1 + $0x168] sm:$0xff]
  %v63 = vld [vmem:[%s1 + $0x170] sm:$0xff]
  %v64 = vld [vmem:[%s1 + $0x178] sm:$0xff]
  %v65 = vld [vmem:[%s1 + $0x180] sm:$0xff]
  %v66 = vld [vmem:[%s0] sm:$0xff]
  %v67 = vld [vmem:[%s0 + $0x8] sm:$0xff]
  %v68 = vld [vmem:[%s0 + $0x10] sm:$0xff]
  %v69 = vld [vmem:[%s0 + $0x18] sm:$0xff]
  %v70 = vlaneseq
  %v71 = vshrl.u32 %v70, 7
  %v72 = vsub.s32 0, %v71
  %v73 = vrot.slane %v11, %v72
  %v74 = vmul.f32 %v66, %v73
  %v75 = vmul.f32 %v67, %v73
  %v76 = vmul.f32 %v68, %v73
  %v77 = vmul.f32 %v69, %v73
  %v78 = vlaneseq
  %v79 = vshrl.u32 %v78, 7
  %v80 = vsub.s32 0, %v79
  %v81 = vrot.slane %v12, %v80
  %v82 = vadd.f32 %v74, %v81
  %v83 = vadd.f32 %v75, %v81
  %v84 = vadd.f32 %v76, %v81
  %v85 = vadd.f32 %v77, %v81
  %vm86 = vcmp.ge.f32.partialorder %v82, 0.0
  %vm87 = vcmp.ge.f32.partialorder %v83, 0.0
  %vm88 = vcmp.ge.f32.partialorder %v84, 0.0
  %vm89 = vcmp.ge.f32.partialorder %v85, 0.0
  %v90 = vlaneseq
  %v91 = vshrl.u32 %v90, 7
  %v92 = vsub.s32 0, %v91
  %v93 = vrot.slane %v13, %v92
  %v94 = vmul.f32 %v93, %v82
  %v95 = vmul.f32 %v93, %v83
  %v96 = vmul.f32 %v93, %v84
  %v97 = vmul.f32 %v93, %v85
  %v98 = vsel %vm86, %v82, %v94
  %v99 = vsel %vm87, %v83, %v95
  %v100 = vsel %vm88, %v84, %v96
  %v101 = vsel %vm89, %v85, %v97
  %v102 = vlaneseq
  %v103 = vshrl.u32 %v102, 7
  %v104 = vsub.s32 0, %v103
  %v105 = vrot.slane %v14, %v104
  %vm106 = vcmask 64512
  %v108 = vsel %vm106, %v98, 0
  %v111 = vsel %vm106, %v99, 0
  %v114 = vsel %vm106, %v100, 0
  %v117 = vsel %vm106, %v101, 0
  %119 = vmatprep.subr.mxu0 0.0
  %120 = vmatpush1.msra.mxu0 %v18
  %121 = vmatprep.subr.mxu0 0.0
  %122 = vmatpush1.msra.mxu0 0.0
  %123 = vmatprep.subr.mxu0 0.0
  %124 = vmatpush1.msra.mxu0 0.0
  %125 = vmatprep.subr.mxu0 0.0
  %126 = vmatpush1.msra.mxu0 0.0
  %127 = vmatprep.subr.mxu0 0.0
  %128 = vmatpush1.msra.mxu0 0.0
  %129 = vmatprep.subr.mxu0 0.0
  %130 = vmatpush1.msra.mxu0 0.0
  %131 = vmatprep.subr.mxu0 0.0
  %132 = vmatpush1.msra.mxu0 0.0
  %133 = vmatprep.subr.mxu0 0.0
  %134 = vmatpush1.msra.mxu0 0.0
  %135 = vmatprep.subr.mxu0 0.0
  %136 = vmatpush1.msra.mxu0 0.0
  %137 = vmatprep.subr.mxu0 0.0
  %138 = vmatpush1.msra.mxu0 0.0
  %139 = vmatprep.subr.mxu0 0.0
  %140 = vmatpush1.msra.mxu0 0.0
  %141 = vmatprep.subr.mxu0 0.0
  %142 = vmatpush1.msra.mxu0 0.0
  %143 = vmatprep.subr.mxu0 0.0
  %144 = vmatpush1.msra.mxu0 0.0
  %145 = vmatprep.subr.mxu0 0.0
  %146 = vmatpush1.msra.mxu0 0.0
  %147 = vmatprep.subr.mxu0 0.0
  %148 = vmatpush1.msra.mxu0 0.0
  %149 = vmatprep.subr.mxu0 0.0
  %150 = vmatpush1.msra.mxu0 0.0
  %151 = vmatprep.subr.mxu0 0.0
  %152 = vmatpush1.msra.mxu0 0.0
  %153 = vmatprep.subr.mxu0 0.0
  %154 = vmatpush1.msra.mxu0 0.0
  %155 = vmatprep.subr.mxu0 0.0
  %156 = vmatpush1.msra.mxu0 0.0
  %157 = vmatprep.subr.mxu0 0.0
  %158 = vmatpush1.msra.mxu0 0.0
  %159 = vmatprep.subr.mxu0 0.0
  %160 = vmatpush1.msra.mxu0 0.0
  %161 = vmatprep.subr.mxu0 0.0
  %162 = vmatpush1.msra.mxu0 0.0
  %163 = vmatprep.subr.mxu0 0.0
  %164 = vmatpush1.msra.mxu0 0.0
  %165 = vmatprep.subr.mxu0 0.0
  %166 = vmatpush1.msra.mxu0 0.0
  %167 = vmatprep.subr.mxu0 0.0
  %168 = vmatpush1.msra.mxu0 0.0
  %169 = vmatprep.subr.mxu0 0.0
  %170 = vmatpush1.msra.mxu0 0.0
  %171 = vmatprep.subr.mxu0 0.0
  %172 = vmatpush1.msra.mxu0 0.0
  %173 = vmatprep.subr.mxu0 0.0
  %174 = vmatpush1.msra.mxu0 0.0
  %175 = vmatprep.subr.mxu0 0.0
  %176 = vmatpush1.msra.mxu0 0.0
  %177 = vmatprep.subr.mxu0 0.0
  %178 = vmatpush1.msra.mxu0 0.0
  %179 = vmatprep.subr.mxu0 0.0
  %180 = vmatpush1.msra.mxu0 0.0
  %181 = vmatprep.subr.mxu0 0.0
  %182 = vmatpush1.msra.mxu0 0.0
  %183 = vmatprep.mubr.f32.mxu0 0.0
  %184 = vmatmul.mubr.f32.gmra.mrb[0].mxu0 %v108
  %v185 = vpop.f32.mrb[0].mxu0
  %v186 = vadd.f32 %v105, %v185
  %v187 = vpop.f32.mrb[0].mxu0
  %188 = vmatprep.mubr.f32.mxu0 0.0
  %189 = vmatmul.mubr.f32.gmra.mrb[0].mxu0 %v111
  %v190 = vpop.f32.mrb[0].mxu0
  %v191 = vadd.f32 %v105, %v190
  %v192 = vpop.f32.mrb[0].mxu0
  %193 = vmatprep.mubr.f32.mxu0 0.0
  %194 = vmatmul.mubr.f32.gmra.mrb[0].mxu0 %v114
  %v195 = vpop.f32.mrb[0].mxu0
  %v196 = vadd.f32 %v105, %v195
  %v197 = vpop.f32.mrb[0].mxu0
  %198 = vmatprep.mubr.f32.mxu0 0.0
  %199 = vmatmul.mubr.f32.gmra.mrb[0].mxu0 %v117
  %v200 = vpop.f32.mrb[0].mxu0
  %v201 = vadd.f32 %v105, %v200
  %v202 = vpop.f32.mrb[0].mxu0
  %203 = vdwg.mxu0
  %vm204 = vcmp.ge.f32.partialorder %v186, 0.0
  %vm205 = vcmp.ge.f32.partialorder %v191, 0.0
  %vm206 = vcmp.ge.f32.partialorder %v196, 0.0
  %vm207 = vcmp.ge.f32.partialorder %v201, 0.0
  %v208 = vlaneseq
  %v209 = vshrl.u32 %v208, 7
  %v210 = vsub.s32 0, %v209
  %v211 = vrot.slane %v15, %v210
  %v212 = vmul.f32 %v211, %v186
  %v213 = vmul.f32 %v211, %v191
  %v214 = vmul.f32 %v211, %v196
  %v215 = vmul.f32 %v211, %v201
  %v216 = vsel %vm204, %v186, %v212
  %v217 = vsel %vm205, %v191, %v213
  %v218 = vsel %vm206, %v196, %v214
  %v219 = vsel %vm207, %v201, %v215
  %vm220 = vcmask 261120
  %v222 = vsel %vm220, %v38, 0
  %v225 = vsel %vm220, %v39, 0
  %v228 = vsel %vm220, %v40, 0
  %v231 = vsel %vm220, %v41, 0
  %v234 = vsel %vm220, %v42, 0
  %v237 = vsel %vm220, %v43, 0
  %v240 = vsel %vm220, %v44, 0
  %v243 = vsel %vm220, %v45, 0
  %v246 = vsel %vm220, %v46, 0
  %v249 = vsel %vm220, %v47, 0
  %v252 = vsel %vm220, %v48, 0
  %v255 = vsel %vm220, %v49, 0
  %v258 = vsel %vm220, %v50, 0
  %v261 = vsel %vm220, %v51, 0
  %v264 = vsel %vm220, %v52, 0
  %v267 = vsel %vm220, %v53, 0
  %v270 = vsel %vm220, %v54, 0
  %v273 = vsel %vm220, %v55, 0
  %v276 = vsel %vm220, %v56, 0
  %v279 = vsel %vm220, %v57, 0
  %v282 = vsel %vm220, %v58, 0
  %v285 = vsel %vm220, %v59, 0
  %v288 = vsel %vm220, %v60, 0
  %v291 = vsel %vm220, %v61, 0
  %v294 = vsel %vm220, %v62, 0
  %v297 = vsel %vm220, %v63, 0
  %v300 = vsel %vm220, %v64, 0
  %v303 = vsel %vm220, %v65, 0
  %305 = vmatprep.subr.mxu0 0.0
  %306 = vmatpush1.msra.mxu0 %v216
  %307 = vmatprep.subr.mxu0 0.0
  %308 = vmatpush1.msra.mxu0 %v217
  %309 = vmatprep.subr.mxu0 0.0
  %310 = vmatpush1.msra.mxu0 %v218
  %311 = vmatprep.subr.mxu0 0.0
  %312 = vmatpush1.msra.mxu0 %v219
  %313 = vmatprep.subr.mxu0 0.0
  %314 = vmatpush1.msra.mxu0 0.0
  %315 = vmatprep.subr.mxu0 0.0
  %316 = vmatpush1.msra.mxu0 0.0
  %317 = vmatprep.subr.mxu0 0.0
  %318 = vmatpush1.msra.mxu0 0.0
  %319 = vmatprep.subr.mxu0 0.0
  %320 = vmatpush1.msra.mxu0 0.0
  %321 = vmatprep.subr.mxu0 0.0
  %322 = vmatpush1.msra.mxu0 0.0
  %323 = vmatprep.subr.mxu0 0.0
  %324 = vmatpush1.msra.mxu0 0.0
  %325 = vmatprep.subr.mxu0 0.0
  %326 = vmatpush1.msra.mxu0 0.0
  %327 = vmatprep.subr.mxu0 0.0
  %328 = vmatpush1.msra.mxu0 0.0
  %329 = vmatprep.subr.mxu0 0.0
  %330 = vmatpush1.msra.mxu0 0.0
  %331 = vmatprep.subr.mxu0 0.0
  %332 = vmatpush1.msra.mxu0 0.0
  %333 = vmatprep.subr.mxu0 0.0
  %334 = vmatpush1.msra.mxu0 0.0
  %335 = vmatprep.subr.mxu0 0.0
  %336 = vmatpush1.msra.mxu0 0.0
  %337 = vmatprep.subr.mxu0 0.0
  %338 = vmatpush1.msra.mxu0 0.0
  %339 = vmatprep.subr.mxu0 0.0
  %340 = vmatpush1.msra.mxu0 0.0
  %341 = vmatprep.subr.mxu0 0.0
  %342 = vmatpush1.msra.mxu0 0.0
  %343 = vmatprep.subr.mxu0 0.0
  %344 = vmatpush1.msra.mxu0 0.0
  %345 = vmatprep.subr.mxu0 0.0
  %346 = vmatpush1.msra.mxu0 0.0
  %347 = vmatprep.subr.mxu0 0.0
  %348 = vmatpush1.msra.mxu0 0.0
  %349 = vmatprep.subr.mxu0 0.0
  %350 = vmatpush1.msra.mxu0 0.0
  %351 = vmatprep.subr.mxu0 0.0
  %352 = vmatpush1.msra.mxu0 0.0
  %353 = vmatprep.subr.mxu0 0.0
  %354 = vmatpush1.msra.mxu0 0.0
  %355 = vmatprep.subr.mxu0 0.0
  %356 = vmatpush1.msra.mxu0 0.0
  %357 = vmatprep.subr.mxu0 0.0
  %358 = vmatpush1.msra.mxu0 0.0
  %359 = vmatprep.subr.mxu0 0.0
  %360 = vmatpush1.msra.mxu0 0.0
  %361 = vmatprep.subr.mxu0 0.0
  %362 = vmatpush1.msra.mxu0 0.0
  %363 = vmatprep.subr.mxu0 0.0
  %364 = vmatpush1.msra.mxu0 0.0
  %365 = vmatprep.subr.mxu0 0.0
  %366 = vmatpush1.msra.mxu0 0.0
  %367 = vmatprep.subr.mxu0 0.0
  %368 = vmatpush1.msra.mxu0 0.0
  %369 = vmatprep.mubr.f32.mxu0 0.0
  %370 = vmatmul.mubr.f32.gmra.mrb[0].mxu0 %v222
  %v371 = vpop.f32.mrb[0].mxu0
  %v372 = vadd.f32 0.0, %v371
  %v373 = vpop.f32.mrb[0].mxu0
  %374 = vmatprep.mubr.f32.mxu0 0.0
  %375 = vmatmul.mubr.f32.gmra.mrb[0].mxu0 %v225
  %v376 = vpop.f32.mrb[0].mxu0
  %v377 = vadd.f32 0.0, %v376
  %v378 = vpop.f32.mrb[0].mxu0
  %379 = vmatprep.mubr.f32.mxu0 0.0
  %380 = vmatmul.mubr.f32.gmra.mrb[0].mxu0 %v228
  %v381 = vpop.f32.mrb[0].mxu0
  %v382 = vadd.f32 0.0, %v381
  %v383 = vpop.f32.mrb[0].mxu0
  %384 = vmatprep.mubr.f32.mxu0 0.0
  %385 = vmatmul.mubr.f32.gmra.mrb[0].mxu0 %v231
  %v386 = vpop.f32.mrb[0].mxu0
  %v387 = vadd.f32 0.0, %v386
  %v388 = vpop.f32.mrb[0].mxu0
  %389 = vmatprep.mubr.f32.mxu0 0.0
  %390 = vmatmul.mubr.f32.gmra.mrb[0].mxu0 %v234
  %v391 = vpop.f32.mrb[0].mxu0
  %v392 = vadd.f32 0.0, %v391
  %v393 = vpop.f32.mrb[0].mxu0
  %394 = vmatprep.mubr.f32.mxu0 0.0
  %395 = vmatmul.mubr.f32.gmra.mrb[0].mxu0 %v237
  %v396 = vpop.f32.mrb[0].mxu0
  %v397 = vadd.f32 0.0, %v396
  %v398 = vpop.f32.mrb[0].mxu0
  %399 = vmatprep.mubr.f32.mxu0 0.0
  %400 = vmatmul.mubr.f32.gmra.mrb[0].mxu0 %v240
  %v401 = vpop.f32.mrb[0].mxu0
  %v402 = vadd.f32 0.0, %v401
  %v403 = vpop.f32.mrb[0].mxu0
  %404 = vmatprep.mubr.f32.mxu0 0.0
  %405 = vmatmul.mubr.f32.gmra.mrb[0].mxu0 %v243
  %v406 = vpop.f32.mrb[0].mxu0
  %v407 = vadd.f32 0.0, %v406
  %v408 = vpop.f32.mrb[0].mxu0
  %409 = vmatprep.mubr.f32.mxu0 0.0
  %410 = vmatmul.mubr.f32.gmra.mrb[0].mxu0 %v246
  %v411 = vpop.f32.mrb[0].mxu0
  %v412 = vadd.f32 0.0, %v411
  %v413 = vpop.f32.mrb[0].mxu0
  %414 = vmatprep.mubr.f32.mxu0 0.0
  %415 = vmatmul.mubr.f32.gmra.mrb[0].mxu0 %v249
  %v416 = vpop.f32.mrb[0].mxu0
  %v417 = vadd.f32 0.0, %v416
  %v418 = vpop.f32.mrb[0].mxu0
  %419 = vmatprep.mubr.f32.mxu0 0.0
  %420 = vmatmul.mubr.f32.gmra.mrb[0].mxu0 %v252
  %v421 = vpop.f32.mrb[0].mxu0
  %v422 = vadd.f32 0.0, %v421
  %v423 = vpop.f32.mrb[0].mxu0
  %424 = vmatprep.mubr.f32.mxu0 0.0
  %425 = vmatmul.mubr.f32.gmra.mrb[0].mxu0 %v255
  %v426 = vpop.f32.mrb[0].mxu0
  %v427 = vadd.f32 0.0, %v426
  %v428 = vpop.f32.mrb[0].mxu0
  %429 = vmatprep.mubr.f32.mxu0 0.0
  %430 = vmatmul.mubr.f32.gmra.mrb[0].mxu0 %v258
  %v431 = vpop.f32.mrb[0].mxu0
  %v432 = vadd.f32 0.0, %v431
  %v433 = vpop.f32.mrb[0].mxu0
  %434 = vmatprep.mubr.f32.mxu0 0.0
  %435 = vmatmul.mubr.f32.gmra.mrb[0].mxu0 %v261
  %v436 = vpop.f32.mrb[0].mxu0
  %v437 = vadd.f32 0.0, %v436
  %v438 = vpop.f32.mrb[0].mxu0
  %439 = vmatprep.mubr.f32.mxu0 0.0
  %440 = vmatmul.mubr.f32.gmra.mrb[0].mxu0 %v264
  %v441 = vpop.f32.mrb[0].mxu0
  %v442 = vadd.f32 0.0, %v441
  %v443 = vpop.f32.mrb[0].mxu0
  %444 = vmatprep.mubr.f32.mxu0 0.0
  %445 = vmatmul.mubr.f32.gmra.mrb[0].mxu0 %v267
  %v446 = vpop.f32.mrb[0].mxu0
  %v447 = vadd.f32 0.0, %v446
  %v448 = vpop.f32.mrb[0].mxu0
  %449 = vmatprep.mubr.f32.mxu0 0.0
  %450 = vmatmul.mubr.f32.gmra.mrb[0].mxu0 %v270
  %v451 = vpop.f32.mrb[0].mxu0
  %v452 = vadd.f32 0.0, %v451
  %v453 = vpop.f32.mrb[0].mxu0
  %454 = vmatprep.mubr.f32.mxu0 0.0
  %455 = vmatmul.mubr.f32.gmra.mrb[0].mxu0 %v273
  %v456 = vpop.f32.mrb[0].mxu0
  %v457 = vadd.f32 0.0, %v456
  %v458 = vpop.f32.mrb[0].mxu0
  %459 = vmatprep.mubr.f32.mxu0 0.0
  %460 = vmatmul.mubr.f32.gmra.mrb[0].mxu0 %v276
  %v461 = vpop.f32.mrb[0].mxu0
  %v462 = vadd.f32 0.0, %v461
  %v463 = vpop.f32.mrb[0].mxu0
  %464 = vmatprep.mubr.f32.mxu0 0.0
  %465 = vmatmul.mubr.f32.gmra.mrb[0].mxu0 %v279
  %v466 = vpop.f32.mrb[0].mxu0
  %v467 = vadd.f32 0.0, %v466
  %v468 = vpop.f32.mrb[0].mxu0
  %469 = vmatprep.mubr.f32.mxu0 0.0
  %470 = vmatmul.mubr.f32.gmra.mrb[0].mxu0 %v282
  %v471 = vpop.f32.mrb[0].mxu0
  %v472 = vadd.f32 0.0, %v471
  %v473 = vpop.f32.mrb[0].mxu0
  %474 = vmatprep.mubr.f32.mxu0 0.0
  %475 = vmatmul.mubr.f32.gmra.mrb[0].mxu0 %v285
  %v476 = vpop.f32.mrb[0].mxu0
  %v477 = vadd.f32 0.0, %v476
  %v478 = vpop.f32.mrb[0].mxu0
  %479 = vmatprep.mubr.f32.mxu0 0.0
  %480 = vmatmul.mubr.f32.gmra.mrb[0].mxu0 %v288
  %v481 = vpop.f32.mrb[0].mxu0
  %v482 = vadd.f32 0.0, %v481
  %v483 = vpop.f32.mrb[0].mxu0
  %484 = vmatprep.mubr.f32.mxu0 0.0
  %485 = vmatmul.mubr.f32.gmra.mrb[0].mxu0 %v291
  %v486 = vpop.f32.mrb[0].mxu0
  %v487 = vadd.f32 0.0, %v486
  %v488 = vpop.f32.mrb[0].mxu0
  %489 = vmatprep.mubr.f32.mxu0 0.0
  %490 = vmatmul.mubr.f32.gmra.mrb[0].mxu0 %v294
  %v491 = vpop.f32.mrb[0].mxu0
  %v492 = vadd.f32 0.0, %v491
  %v493 = vpop.f32.mrb[0].mxu0
  %494 = vmatprep.mubr.f32.mxu0 0.0
  %495 = vmatmul.mubr.f32.gmra.mrb[0].mxu0 %v297
  %v496 = vpop.f32.mrb[0].mxu0
  %v497 = vadd.f32 0.0, %v496
  %v498 = vpop.f32.mrb[0].mxu0
  %499 = vmatprep.mubr.f32.mxu0 0.0
  %500 = vmatmul.mubr.f32.gmra.mrb[0].mxu0 %v300
  %v501 = vpop.f32.mrb[0].mxu0
  %v502 = vadd.f32 0.0, %v501
  %v503 = vpop.f32.mrb[0].mxu0
  %504 = vmatprep.mubr.f32.mxu0 0.0
  %505 = vmatmul.mubr.f32.gmra.mrb[0].mxu0 %v303
  %v506 = vpop.f32.mrb[0].mxu0
  %v507 = vadd.f32 0.0, %v506
  %v508 = vpop.f32.mrb[0].mxu0
  %509 = vdwg.mxu0
  %514 = vrot.lane.b32.xlu0 %v392, 16
  %v515 = vpop.permute.xlu0 %514
  %516 = vrot.lane.b32.xlu0 %v397, 16
  %v517 = vpop.permute.xlu0 %516
  %518 = vrot.lane.b32.xlu0 %v402, 16
  %v519 = vpop.permute.xlu0 %518
  %520 = vrot.lane.b32.xlu0 %v407, 16
  %v521 = vpop.permute.xlu0 %520
  %530 = vrot.lane.b32.xlu0 %v412, 32
  %v531 = vpop.permute.xlu0 %530
  %532 = vrot.lane.b32.xlu0 %v417, 32
  %v533 = vpop.permute.xlu0 %532
  %534 = vrot.lane.b32.xlu0 %v422, 32
  %v535 = vpop.permute.xlu0 %534
  %536 = vrot.lane.b32.xlu0 %v427, 32
  %v537 = vpop.permute.xlu0 %536
  %546 = vrot.lane.b32.xlu0 %v432, 48
  %v547 = vpop.permute.xlu0 %546
  %548 = vrot.lane.b32.xlu0 %v437, 48
  %v549 = vpop.permute.xlu0 %548
  %550 = vrot.lane.b32.xlu0 %v442, 48
  %v551 = vpop.permute.xlu0 %550
  %552 = vrot.lane.b32.xlu0 %v447, 48
  %v553 = vpop.permute.xlu0 %552
  %562 = vrot.lane.b32.xlu0 %v452, 64
  %v563 = vpop.permute.xlu0 %562
  %564 = vrot.lane.b32.xlu0 %v457, 64
  %v565 = vpop.permute.xlu0 %564
  %566 = vrot.lane.b32.xlu0 %v462, 64
  %v567 = vpop.permute.xlu0 %566
  %568 = vrot.lane.b32.xlu0 %v467, 64
  %v569 = vpop.permute.xlu0 %568
  %578 = vrot.lane.b32.xlu0 %v472, 80
  %v579 = vpop.permute.xlu0 %578
  %580 = vrot.lane.b32.xlu0 %v477, 80
  %v581 = vpop.permute.xlu0 %580
  %582 = vrot.lane.b32.xlu0 %v482, 80
  %v583 = vpop.permute.xlu0 %582
  %584 = vrot.lane.b32.xlu0 %v487, 80
  %v585 = vpop.permute.xlu0 %584
  %594 = vrot.lane.b32.xlu0 %v492, 96
  %v595 = vpop.permute.xlu0 %594
  %596 = vrot.lane.b32.xlu0 %v497, 96
  %v597 = vpop.permute.xlu0 %596
  %598 = vrot.lane.b32.xlu0 %v502, 96
  %v599 = vpop.permute.xlu0 %598
  %600 = vrot.lane.b32.xlu0 %v507, 96
  %v601 = vpop.permute.xlu0 %600
  %vm606 = vcmask 130048
  %v607 = vsel %vm606, %v372, %v515
  %v608 = vsel %vm606, %v377, %v517
  %v609 = vsel %vm606, %v382, %v519
  %v610 = vsel %vm606, %v387, %v521
  %v611 = vsel %vm220, %v607, %v531
  %v612 = vsel %vm220, %v608, %v533
  %v613 = vsel %vm220, %v609, %v535
  %v614 = vsel %vm220, %v610, %v537
  %vm615 = vcmask 392192
  %v616 = vsel %vm615, %v611, %v547
  %v617 = vsel %vm615, %v612, %v549
  %v618 = vsel %vm615, %v613, %v551
  %v619 = vsel %vm615, %v614, %v553
  %vm620 = vcmask 523264
  %v621 = vsel %vm620, %v616, %v563
  %v622 = vsel %vm620, %v617, %v565
  %v623 = vsel %vm620, %v618, %v567
  %v624 = vsel %vm620, %v619, %v569
  %vm625 = vcmask 654336
  %v626 = vsel %vm625, %v621, %v579
  %v627 = vsel %vm625, %v622, %v581
  %v628 = vsel %vm625, %v623, %v583
  %v629 = vsel %vm625, %v624, %v585
  %vm630 = vcmask 785408
  %v631 = vsel %vm630, %v626, %v595
  %v632 = vsel %vm630, %v627, %v597
  %v633 = vsel %vm630, %v628, %v599
  %v634 = vsel %vm630, %v629, %v601
  %vm635 = vcmask 916480
  %v637 = vsel %vm635, %v631, 0
  %v640 = vsel %vm635, %v632, 0
  %v643 = vsel %vm635, %v633, 0
  %v646 = vsel %vm635, %v634, 0
  %648 = vmatprep.subr.mxu0 0.0
  %649 = vmatpush1.msra.mxu0 %v19
  %650 = vmatprep.subr.mxu0 0.0
  %651 = vmatpush1.msra.mxu0 %v20
  %652 = vmatprep.subr.mxu0 0.0
  %653 = vmatpush1.msra.mxu0 %v21
  %654 = vmatprep.subr.mxu0 0.0
  %655 = vmatpush1.msra.mxu0 %v22
  %656 = vmatprep.subr.mxu0 0.0
  %657 = vmatpush1.msra.mxu0 %v23
  %658 = vmatprep.subr.mxu0 0.0
  %659 = vmatpush1.msra.mxu0 %v24
  %660 = vmatprep.subr.mxu0 0.0
  %661 = vmatpush1.msra.mxu0 %v25
  %662 = vmatprep.subr.mxu0 0.0
  %663 = vmatpush1.msra.mxu0 %v26
  %664 = vmatprep.subr.mxu0 0.0
  %665 = vmatpush1.msra.mxu0 %v27
  %666 = vmatprep.subr.mxu0 0.0
  %667 = vmatpush1.msra.mxu0 %v28
  %668 = vmatprep.subr.mxu0 0.0
  %669 = vmatpush1.msra.mxu0 %v29
  %670 = vmatprep.subr.mxu0 0.0
  %671 = vmatpush1.msra.mxu0 %v30
  %672 = vmatprep.subr.mxu0 0.0
  %673 = vmatpush1.msra.mxu0 %v31
  %674 = vmatprep.subr.mxu0 0.0
  %675 = vmatpush1.msra.mxu0 %v32
  %676 = vmatprep.subr.mxu0 0.0
  %677 = vmatpush1.msra.mxu0 0.0
  %678 = vmatprep.subr.mxu0 0.0
  %679 = vmatpush1.msra.mxu0 0.0
  %680 = vmatprep.subr.mxu0 0.0
  %681 = vmatpush1.msra.mxu0 0.0
  %682 = vmatprep.subr.mxu0 0.0
  %683 = vmatpush1.msra.mxu0 0.0
  %684 = vmatprep.subr.mxu0 0.0
  %685 = vmatpush1.msra.mxu0 0.0
  %686 = vmatprep.subr.mxu0 0.0
  %687 = vmatpush1.msra.mxu0 0.0
  %688 = vmatprep.subr.mxu0 0.0
  %689 = vmatpush1.msra.mxu0 0.0
  %690 = vmatprep.subr.mxu0 0.0
  %691 = vmatpush1.msra.mxu0 0.0
  %692 = vmatprep.subr.mxu0 0.0
  %693 = vmatpush1.msra.mxu0 0.0
  %694 = vmatprep.subr.mxu0 0.0
  %695 = vmatpush1.msra.mxu0 0.0
  %696 = vmatprep.subr.mxu0 0.0
  %697 = vmatpush1.msra.mxu0 0.0
  %698 = vmatprep.subr.mxu0 0.0
  %699 = vmatpush1.msra.mxu0 0.0
  %700 = vmatprep.subr.mxu0 0.0
  %701 = vmatpush1.msra.mxu0 0.0
  %702 = vmatprep.subr.mxu0 0.0
  %703 = vmatpush1.msra.mxu0 0.0
  %704 = vmatprep.subr.mxu0 0.0
  %705 = vmatpush1.msra.mxu0 0.0
  %706 = vmatprep.subr.mxu0 0.0
  %707 = vmatpush1.msra.mxu0 0.0
  %708 = vmatprep.subr.mxu0 0.0
  %709 = vmatpush1.msra.mxu0 0.0
  %710 = vmatprep.subr.mxu0 0.0
  %711 = vmatpush1.msra.mxu0 0.0
  %712 = vmatprep.mubr.f32.mxu0 0.0
  %713 = vmatmul.mubr.f32.gmra.mrb[0].mxu0 %v637
  %v714 = vpop.f32.mrb[0].mxu0
  %v715 = vadd.f32 0.0, %v714
  %v716 = vpop.f32.mrb[0].mxu0
  %717 = vmatprep.mubr.f32.mxu0 0.0
  %718 = vmatmul.mubr.f32.gmra.mrb[0].mxu0 %v640
  %v719 = vpop.f32.mrb[0].mxu0
  %v720 = vadd.f32 0.0, %v719
  %v721 = vpop.f32.mrb[0].mxu0
  %722 = vmatprep.mubr.f32.mxu0 0.0
  %723 = vmatmul.mubr.f32.gmra.mrb[0].mxu0 %v643
  %v724 = vpop.f32.mrb[0].mxu0
  %v725 = vadd.f32 0.0, %v724
  %v726 = vpop.f32.mrb[0].mxu0
  %727 = vmatprep.mubr.f32.mxu0 0.0
  %728 = vmatmul.mubr.f32.gmra.mrb[0].mxu0 %v646
  %v729 = vpop.f32.mrb[0].mxu0
  %v730 = vadd.f32 0.0, %v729
  %v731 = vpop.f32.mrb[0].mxu0
  %732 = vdwg.mxu0
  %737 = vrot.lane.b32.xlu0 %v715, 120
  %v738 = vpop.permute.xlu0 %737
  %739 = vrot.lane.b32.xlu0 %v720, 120
  %v740 = vpop.permute.xlu0 %739
  %741 = vrot.lane.b32.xlu0 %v725, 120
  %v742 = vpop.permute.xlu0 %741
  %743 = vrot.lane.b32.xlu0 %v730, 120
  %v744 = vpop.permute.xlu0 %743
  %v749 = vadd.f32 %v715, %v738
  %v750 = vadd.f32 %v720, %v740
  %v751 = vadd.f32 %v725, %v742
  %v752 = vadd.f32 %v730, %v744
  %753 = vrot.lane.b32.xlu0 %v715, 112
  %v754 = vpop.permute.xlu0 %753
  %755 = vrot.lane.b32.xlu0 %v720, 112
  %v756 = vpop.permute.xlu0 %755
  %757 = vrot.lane.b32.xlu0 %v725, 112
  %v758 = vpop.permute.xlu0 %757
  %759 = vrot.lane.b32.xlu0 %v730, 112
  %v760 = vpop.permute.xlu0 %759
  %v765 = vadd.f32 %v749, %v754
  %v766 = vadd.f32 %v750, %v756
  %v767 = vadd.f32 %v751, %v758
  %v768 = vadd.f32 %v752, %v760
  %v769 = vsel %vm106, %v765, 0.0
  %v770 = vsel %vm106, %v766, 0.0
  %v771 = vadd.f32 %v769, %v770
  %v772 = vrot.slane %v771, 4
  %v773 = vadd.f32 %v771, %v772
  %v774 = vrot.slane %v773, 2
  %v775 = vadd.f32 %v773, %v774
  %v776 = vrot.slane %v775, 1
  %v777 = vadd.f32 %v775, %v776
  %v778 = vrcp.pop 16.0
  %v779 = vmul.f32 %v777, %v778
  %v780 = vsub.f32 %v765, %v779
  %v781 = vsub.f32 %v766, %v779
  %v782 = vmul.f32 %v780, %v780
  %v783 = vmul.f32 %v781, %v781
  %v784 = vsel %vm106, %v782, 0.0
  %v785 = vsel %vm106, %v783, 0.0
  %v786 = vadd.f32 %v784, %v785
  %v787 = vrot.slane %v786, 4
  %v788 = vadd.f32 %v786, %v787
  %v789 = vrot.slane %v788, 2
  %v790 = vadd.f32 %v788, %v789
  %v791 = vrot.slane %v790, 1
  %v792 = vadd.f32 %v790, %v791
  %v793 = vmul.f32 %v792, 0.06666667
  %v794 = vrsqrt.pop %v793
  %v795 = vmul.f32 %v793, %v794
  %vm796 = vcmp.eq.f32.partialorder %v793, inf
  %v797 = vsel %vm796, %v793, %v795
  %vm798 = vcmp.eq.f32.partialorder %v793, 0.0
  %v799 = vand.u32 %v793, 2147483648
  %v800 = vsel %vm798, %v799, %v797
  %v801 = vmax.f32 %v800, 1e-08
  %v802 = vrcp.pop %v801
  %v803 = vmul.f32 1.0, %v802
  %v804 = vmul.f32 %v780, %v803
  %v805 = vmul.f32 %v781, %v803
  %v806 = vmul.f32 %v804, %v804
  %v807 = vmul.f32 %v805, %v805
  %v808 = vmul.f32 %v806, %v804
  %v809 = vmul.f32 %v807, %v805
  %v810 = vsel %vm106, %v808, 0.0
  %v811 = vsel %vm106, %v809, 0.0
  %v812 = vadd.f32 %v810, %v811
  %v813 = vrot.slane %v812, 4
  %v814 = vadd.f32 %v812, %v813
  %v815 = vrot.slane %v814, 2
  %v816 = vadd.f32 %v814, %v815
  %v817 = vrot.slane %v816, 1
  %v818 = vadd.f32 %v816, %v817
  %v819 = vmul.f32 %v818, %v778
  %v820 = vmul.f32 %v806, %v806
  %v821 = vmul.f32 %v807, %v807
  %v822 = vsel %vm106, %v820, 0.0
  %v823 = vsel %vm106, %v821, 0.0
  %v824 = vadd.f32 %v822, %v823
  %v825 = vrot.slane %v824, 4
  %v826 = vadd.f32 %v824, %v825
  %v827 = vrot.slane %v826, 2
  %v828 = vadd.f32 %v826, %v827
  %v829 = vrot.slane %v828, 1
  %v830 = vadd.f32 %v828, %v829
  %v831 = vmul.f32 %v830, %v778
  %833 = vrot.lane.b32.xlu0 %v800, 8
  %v834 = vpop.permute.xlu0 %833
  %837 = vrot.lane.b32.xlu0 %v819, 16
  %v838 = vpop.permute.xlu0 %837
  %841 = vrot.lane.b32.xlu0 %v831, 24
  %v842 = vpop.permute.xlu0 %841
  %v844 = vsel %vm106, %v779, %v834
  %v845 = vsel %vm606, %v844, %v838
  %vm846 = vcmask 195584
  %v847 = vsel %vm846, %v845, %v842
  %v848 = vsel %vm106, %v767, 0.0
  %v849 = vsel %vm106, %v768, 0.0
  %v850 = vadd.f32 %v848, %v849
  %v851 = vrot.slane %v850, 4
  %v852 = vadd.f32 %v850, %v851
  %v853 = vrot.slane %v852, 2
  %v854 = vadd.f32 %v852, %v853
  %v855 = vrot.slane %v854, 1
  %v856 = vadd.f32 %v854, %v855
  %v857 = vmul.f32 %v856, %v778
  %v858 = vsub.f32 %v767, %v857
  %v859 = vsub.f32 %v768, %v857
  %v860 = vmul.f32 %v858, %v858
  %v861 = vmul.f32 %v859, %v859
  %v862 = vsel %vm106, %v860, 0.0
  %v863 = vsel %vm106, %v861, 0.0
  %v864 = vadd.f32 %v862, %v863
  %v865 = vrot.slane %v864, 4
  %v866 = vadd.f32 %v864, %v865
  %v867 = vrot.slane %v866, 2
  %v868 = vadd.f32 %v866, %v867
  %v869 = vrot.slane %v868, 1
  %v870 = vadd.f32 %v868, %v869
  %v871 = vmul.f32 %v870, 0.06666667
  %v872 = vrsqrt.pop %v871
  %v873 = vmul.f32 %v871, %v872
  %vm874 = vcmp.eq.f32.partialorder %v871, inf
  %v875 = vsel %vm874, %v871, %v873
  %vm876 = vcmp.eq.f32.partialorder %v871, 0.0
  %v877 = vand.u32 %v871, 2147483648
  %v878 = vsel %vm876, %v877, %v875
  %v879 = vmax.f32 %v878, 1e-08
  %v880 = vrcp.pop %v879
  %v881 = vmul.f32 1.0, %v880
  %v882 = vmul.f32 %v858, %v881
  %v883 = vmul.f32 %v859, %v881
  %v884 = vmul.f32 %v882, %v882
  %v885 = vmul.f32 %v883, %v883
  %v886 = vmul.f32 %v884, %v882
  %v887 = vmul.f32 %v885, %v883
  %v888 = vsel %vm106, %v886, 0.0
  %v889 = vsel %vm106, %v887, 0.0
  %v890 = vadd.f32 %v888, %v889
  %v891 = vrot.slane %v890, 4
  %v892 = vadd.f32 %v890, %v891
  %v893 = vrot.slane %v892, 2
  %v894 = vadd.f32 %v892, %v893
  %v895 = vrot.slane %v894, 1
  %v896 = vadd.f32 %v894, %v895
  %v897 = vmul.f32 %v896, %v778
  %v898 = vmul.f32 %v884, %v884
  %v899 = vmul.f32 %v885, %v885
  %v900 = vsel %vm106, %v898, 0.0
  %v901 = vsel %vm106, %v899, 0.0
  %v902 = vadd.f32 %v900, %v901
  %v903 = vrot.slane %v902, 4
  %v904 = vadd.f32 %v902, %v903
  %v905 = vrot.slane %v904, 2
  %v906 = vadd.f32 %v904, %v905
  %v907 = vrot.slane %v906, 1
  %v908 = vadd.f32 %v906, %v907
  %v909 = vmul.f32 %v908, %v778
  %911 = vrot.lane.b32.xlu0 %v878, 8
  %v912 = vpop.permute.xlu0 %911
  %915 = vrot.lane.b32.xlu0 %v897, 16
  %v916 = vpop.permute.xlu0 %915
  %919 = vrot.lane.b32.xlu0 %v909, 24
  %v920 = vpop.permute.xlu0 %919
  %v922 = vsel %vm106, %v857, %v912
  %v923 = vsel %vm606, %v922, %v916
  %v924 = vsel %vm846, %v923, %v920
  %v926 = vrot.slane %v924, 7
  %vm928 = vcmask 1040384
  %v929 = vsel %vm928, %v847, %v926
  %v930 = vlaneseq
  %v931 = vshrl.u32 %v930, 7
  %v932 = vsub.s32 0, %v931
  %v933 = vrot.slane %v16, %v932
  %v935 = vsel %vm220, %v929, 0
  %937 = vmatprep.subr.mxu0 0.0
  %938 = vmatpush1.msra.mxu0 %v33
  %939 = vmatprep.subr.mxu0 0.0
  %940 = vmatpush1.msra.mxu0 %v34
  %941 = vmatprep.subr.mxu0 0.0
  %942 = vmatpush1.msra.mxu0 %v35
  %943 = vmatprep.subr.mxu0 0.0
  %944 = vmatpush1.msra.mxu0 %v36
  %945 = vmatprep.subr.mxu0 0.0
  %946 = vmatpush1.msra.mxu0 0.0
  %947 = vmatprep.subr.mxu0 0.0
  %948 = vmatpush1.msra.mxu0 0.0
  %949 = vmatprep.subr.mxu0 0.0
  %950 = vmatpush1.msra.mxu0 0.0
  %951 = vmatprep.subr.mxu0 0.0
  %952 = vmatpush1.msra.mxu0 0.0
  %953 = vmatprep.subr.mxu0 0.0
  %954 = vmatpush1.msra.mxu0 0.0
  %955 = vmatprep.subr.mxu0 0.0
  %956 = vmatpush1.msra.mxu0 0.0
  %957 = vmatprep.subr.mxu0 0.0
  %958 = vmatpush1.msra.mxu0 0.0
  %959 = vmatprep.subr.mxu0 0.0
  %960 = vmatpush1.msra.mxu0 0.0
  %961 = vmatprep.subr.mxu0 0.0
  %962 = vmatpush1.msra.mxu0 0.0
  %963 = vmatprep.subr.mxu0 0.0
  %964 = vmatpush1.msra.mxu0 0.0
  %965 = vmatprep.subr.mxu0 0.0
  %966 = vmatpush1.msra.mxu0 0.0
  %967 = vmatprep.subr.mxu0 0.0
  %968 = vmatpush1.msra.mxu0 0.0
  %969 = vmatprep.subr.mxu0 0.0
  %970 = vmatpush1.msra.mxu0 0.0
  %971 = vmatprep.subr.mxu0 0.0
  %972 = vmatpush1.msra.mxu0 0.0
  %973 = vmatprep.subr.mxu0 0.0
  %974 = vmatpush1.msra.mxu0 0.0
  %975 = vmatprep.subr.mxu0 0.0
  %976 = vmatpush1.msra.mxu0 0.0
  %977 = vmatprep.subr.mxu0 0.0
  %978 = vmatpush1.msra.mxu0 0.0
  %979 = vmatprep.subr.mxu0 0.0
  %980 = vmatpush1.msra.mxu0 0.0
  %981 = vmatprep.subr.mxu0 0.0
  %982 = vmatpush1.msra.mxu0 0.0
  %983 = vmatprep.subr.mxu0 0.0
  %984 = vmatpush1.msra.mxu0 0.0
  %985 = vmatprep.subr.mxu0 0.0
  %986 = vmatpush1.msra.mxu0 0.0
  %987 = vmatprep.subr.mxu0 0.0
  %988 = vmatpush1.msra.mxu0 0.0
  %989 = vmatprep.subr.mxu0 0.0
  %990 = vmatpush1.msra.mxu0 0.0
  %991 = vmatprep.subr.mxu0 0.0
  %992 = vmatpush1.msra.mxu0 0.0
  %993 = vmatprep.subr.mxu0 0.0
  %994 = vmatpush1.msra.mxu0 0.0
  %995 = vmatprep.subr.mxu0 0.0
  %996 = vmatpush1.msra.mxu0 0.0
  %997 = vmatprep.subr.mxu0 0.0
  %998 = vmatpush1.msra.mxu0 0.0
  %999 = vmatprep.subr.mxu0 0.0
  %1000 = vmatpush1.msra.mxu0 0.0
  %1001 = vmatprep.mubr.f32.mxu0 0.0
  %1002 = vmatmul.mubr.f32.gmra.mrb[0].mxu0 %v935
  %v1003 = vpop.f32.mrb[0].mxu0
  %v1004 = vadd.f32 %v933, %v1003
  %v1005 = vpop.f32.mrb[0].mxu0
  %1006 = vdwg.mxu0
  %v1007 = vlaneseq
  %v1008 = vshrl.u32 %v1007, 7
  %v1009 = vsub.s32 0, %v1008
  %v1010 = vrot.slane %v17, %v1009
  %v1012 = vsel %vm106, %v1004, 0
  %1014 = vmatprep.subr.mxu0 0.0
  %1015 = vmatpush1.msra.mxu0 %v37
  %1016 = vmatprep.subr.mxu0 0.0
  %1017 = vmatpush1.msra.mxu0 0.0
  %1018 = vmatprep.subr.mxu0 0.0
  %1019 = vmatpush1.msra.mxu0 0.0
  %1020 = vmatprep.subr.mxu0 0.0
  %1021 = vmatpush1.msra.mxu0 0.0
  %1022 = vmatprep.subr.mxu0 0.0
  %1023 = vmatpush1.msra.mxu0 0.0
  %1024 = vmatprep.subr.mxu0 0.0
  %1025 = vmatpush1.msra.mxu0 0.0
  %1026 = vmatprep.subr.mxu0 0.0
  %1027 = vmatpush1.msra.mxu0 0.0
  %1028 = vmatprep.subr.mxu0 0.0
  %1029 = vmatpush1.msra.mxu0 0.0
  %1030 = vmatprep.subr.mxu0 0.0
  %1031 = vmatpush1.msra.mxu0 0.0
  %1032 = vmatprep.subr.mxu0 0.0
  %1033 = vmatpush1.msra.mxu0 0.0
  %1034 = vmatprep.subr.mxu0 0.0
  %1035 = vmatpush1.msra.mxu0 0.0
  %1036 = vmatprep.subr.mxu0 0.0
  %1037 = vmatpush1.msra.mxu0 0.0
  %1038 = vmatprep.subr.mxu0 0.0
  %1039 = vmatpush1.msra.mxu0 0.0
  %1040 = vmatprep.subr.mxu0 0.0
  %1041 = vmatpush1.msra.mxu0 0.0
  %1042 = vmatprep.subr.mxu0 0.0
  %1043 = vmatpush1.msra.mxu0 0.0
  %1044 = vmatprep.subr.mxu0 0.0
  %1045 = vmatpush1.msra.mxu0 0.0
  %1046 = vmatprep.subr.mxu0 0.0
  %1047 = vmatpush1.msra.mxu0 0.0
  %1048 = vmatprep.subr.mxu0 0.0
  %1049 = vmatpush1.msra.mxu0 0.0
  %1050 = vmatprep.subr.mxu0 0.0
  %1051 = vmatpush1.msra.mxu0 0.0
  %1052 = vmatprep.subr.mxu0 0.0
  %1053 = vmatpush1.msra.mxu0 0.0
  %1054 = vmatprep.subr.mxu0 0.0
  %1055 = vmatpush1.msra.mxu0 0.0
  %1056 = vmatprep.subr.mxu0 0.0
  %1057 = vmatpush1.msra.mxu0 0.0
  %1058 = vmatprep.subr.mxu0 0.0
  %1059 = vmatpush1.msra.mxu0 0.0
  %1060 = vmatprep.subr.mxu0 0.0
  %1061 = vmatpush1.msra.mxu0 0.0
  %1062 = vmatprep.subr.mxu0 0.0
  %1063 = vmatpush1.msra.mxu0 0.0
  %1064 = vmatprep.subr.mxu0 0.0
  %1065 = vmatpush1.msra.mxu0 0.0
  %1066 = vmatprep.subr.mxu0 0.0
  %1067 = vmatpush1.msra.mxu0 0.0
  %1068 = vmatprep.subr.mxu0 0.0
  %1069 = vmatpush1.msra.mxu0 0.0
  %1070 = vmatprep.subr.mxu0 0.0
  %1071 = vmatpush1.msra.mxu0 0.0
  %1072 = vmatprep.subr.mxu0 0.0
  %1073 = vmatpush1.msra.mxu0 0.0
  %1074 = vmatprep.subr.mxu0 0.0
  %1075 = vmatpush1.msra.mxu0 0.0
  %1076 = vmatprep.subr.mxu0 0.0
  %1077 = vmatpush1.msra.mxu0 0.0
  %1078 = vmatprep.mubr.f32.mxu0 0.0
  %1079 = vmatmul.mubr.f32.gmra.mrb[0].mxu0 %v1012
  %v1080 = vpop.f32.mrb[0].mxu0
  %v1081 = vadd.f32 %v1010, %v1080
  %v1082 = vpop.f32.mrb[0].mxu0
  %1083 = vdwg.mxu0
  %1085 = vrot.lane.b32.xlu0 %v1081, 120
  %v1086 = vpop.permute.xlu0 %1085
  %v1088 = vmax.f32 %v1081, %v1086
  %1089 = vrot.lane.b32.xlu0 %v1081, 112
  %v1090 = vpop.permute.xlu0 %1089
  %v1092 = vmax.f32 %v1088, %v1090
  %v1093 = vsub.f32 %v1081, %v1092
  %v1094 = vmul.f32 %v1093, 1.442695
  %v1095 = vpow.pop %v1094
  %1097 = vrot.lane.b32.xlu0 %v1092, 8
  %v1098 = vpop.permute.xlu0 %1097
  %v1100 = vsub.f32 %v1081, %v1098
  %v1101 = vmul.f32 %v1100, 1.442695
  %v1102 = vpow.pop %v1101
  %1103 = vrot.lane.b32.xlu0 %v1092, 16
  %v1104 = vpop.permute.xlu0 %1103
  %v1106 = vsub.f32 %v1081, %v1104
  %v1107 = vmul.f32 %v1106, 1.442695
  %v1108 = vpow.pop %v1107
  %1110 = vrot.lane.b32.xlu0 %v1102, 120
  %v1111 = vpop.permute.xlu0 %1110
  %v1113 = vadd.f32 %v1095, %v1111
  %1115 = vrot.lane.b32.xlu0 %v1108, 112
  %v1116 = vpop.permute.xlu0 %1115
  %v1118 = vadd.f32 %v1113, %v1116
  %v1119 = vrcp.pop %v1118
  %v1120 = vmul.f32 1.0, %v1119
  %v1121 = vmul.f32 %v1095, %v1120
  %1123 = vrot.lane.b32.xlu0 %v1120, 8
  %v1124 = vpop.permute.xlu0 %1123
  %v1126 = vmul.f32 %v1102, %v1124
  %1127 = vrot.lane.b32.xlu0 %v1120, 16
  %v1128 = vpop.permute.xlu0 %1127
  %v1130 = vmul.f32 %v1108, %v1128
  %v1131 = vlaneseq
  %v1132 = vshrl.u32 %v1131, 7
  %v1133 = vsub.s32 0, %v1132
  %v1134 = vrot.slane %v1121, %v1133
  %v1135 = vmul.f32 %v715, %v1134
  %v1136 = vmul.f32 %v720, %v1134
  %v1137 = vlaneseq
  %v1138 = vshrl.u32 %v1137, 7
  %v1139 = vsub.s32 0, %v1138
  %v1140 = vrot.slane %v1126, %v1139
  %v1141 = vmul.f32 %v715, %v1140
  %v1142 = vmul.f32 %v720, %v1140
  %1145 = vrot.lane.b32.xlu0 %v1141, 120
  %v1146 = vpop.permute.xlu0 %1145
  %1147 = vrot.lane.b32.xlu0 %v1142, 120
  %v1148 = vpop.permute.xlu0 %1147
  %v1151 = vadd.f32 %v1135, %v1146
  %v1152 = vadd.f32 %v1136, %v1148
  %v1153 = vlaneseq
  %v1154 = vshrl.u32 %v1153, 7
  %v1155 = vsub.s32 0, %v1154
  %v1156 = vrot.slane %v1130, %v1155
  %v1157 = vmul.f32 %v715, %v1156
  %v1158 = vmul.f32 %v720, %v1156
  %1161 = vrot.lane.b32.xlu0 %v1157, 112
  %v1162 = vpop.permute.xlu0 %1161
  %1163 = vrot.lane.b32.xlu0 %v1158, 112
  %v1164 = vpop.permute.xlu0 %1163
  %v1167 = vadd.f32 %v1151, %v1162
  %v1168 = vadd.f32 %v1152, %v1164
  %1171 = vrot.lane.b32.xlu0 %v1167, 8
  %v1172 = vpop.permute.xlu0 %1171
  %1173 = vrot.lane.b32.xlu0 %v1168, 8
  %v1174 = vpop.permute.xlu0 %1173
  %v1177 = vsel %vm106, %v66, %v1172
  %v1178 = vsel %vm106, %v67, %v1174
  %v1179 = vlaneseq
  %v1180 = vshrl.u32 %v1179, 7
  %v1181 = vsub.s32 1, %v1180
  %v1182 = vrot.slane %v1121, %v1181
  %v1183 = vmul.f32 %v725, %v1182
  %v1184 = vmul.f32 %v730, %v1182
  %v1185 = vlaneseq
  %v1186 = vshrl.u32 %v1185, 7
  %v1187 = vsub.s32 1, %v1186
  %v1188 = vrot.slane %v1126, %v1187
  %v1189 = vmul.f32 %v725, %v1188
  %v1190 = vmul.f32 %v730, %v1188
  %1193 = vrot.lane.b32.xlu0 %v1189, 120
  %v1194 = vpop.permute.xlu0 %1193
  %1195 = vrot.lane.b32.xlu0 %v1190, 120
  %v1196 = vpop.permute.xlu0 %1195
  %v1199 = vadd.f32 %v1183, %v1194
  %v1200 = vadd.f32 %v1184, %v1196
  %v1201 = vlaneseq
  %v1202 = vshrl.u32 %v1201, 7
  %v1203 = vsub.s32 1, %v1202
  %v1204 = vrot.slane %v1130, %v1203
  %v1205 = vmul.f32 %v725, %v1204
  %v1206 = vmul.f32 %v730, %v1204
  %1209 = vrot.lane.b32.xlu0 %v1205, 112
  %v1210 = vpop.permute.xlu0 %1209
  %1211 = vrot.lane.b32.xlu0 %v1206, 112
  %v1212 = vpop.permute.xlu0 %1211
  %v1215 = vadd.f32 %v1199, %v1210
  %v1216 = vadd.f32 %v1200, %v1212
  %1219 = vrot.lane.b32.xlu0 %v1215, 8
  %v1220 = vpop.permute.xlu0 %1219
  %1221 = vrot.lane.b32.xlu0 %v1216, 8
  %v1222 = vpop.permute.xlu0 %1221
  %v1225 = vsel %vm106, %v68, %v1220
  %v1226 = vsel %vm106, %v69, %v1222
  %1227 = vst.msk [vmem:[%s2] sm:$0xff] %vm606, %v1177
  %1228 = vst.msk [vmem:[%s2 + $0x8] sm:$0xff] %vm606, %v1178
  %1229 = vst.msk [vmem:[%s2 + $0x10] sm:$0xff] %vm606, %v1225
  %1230 = vst.msk [vmem:[%s2 + $0x18] sm:$0xff] %vm606, %v1226
  // Predicated region
  $region10: #{dtdnnss_forward.1} parent=0 // pred_check
    _
  $region11: #{dtdnnss_forward.1} parent=0 // pred_check_branch
    %1232 = sbr.rel (0) target = $region13
  $region12: #{dtdnnss_forward.1} parent=0 // pred_region
    _
  $region13: #{dtdnnss_forward.1} parent=0 // pred_fallthru
    _
  // Predicated region
  $region14: #{dtdnnss_forward.1} parent=0 // pred_check
    _
  $region15: #{dtdnnss_forward.1} parent=0 // pred_check_branch
    %1234 = sbr.rel (0) target = $region17
  $region16: #{dtdnnss_forward.1} parent=0 // pred_region
    _
  $region17: #{dtdnnss_forward.1} parent=0 // pred_fallthru
    _

</llo_original>
